<compile_context>
chip_gen: v7x
topology: tpu7x:2x2x1
jax: 0.10.0
libtpu: 0.0.40
codegen_flags: <defaults>
</compile_context>

<pallas_src>
import numpy as np
import jax
import jax.numpy as jnp
from jax import lax
from jax.experimental import pallas as pl
from jax.experimental.pallas import tpu as pltpu


def _lstm_kernel(x_ref,       # (B*T, I)  f32   row = b*T + t (natural flatten of (B,T,I))
                 w_ih_ref,    # (I, 4H)   f32   fused input weights  [i|f|g|o]
                 w_hh_ref,    # (H, 4H)   bf16  fused hidden weights [i|f|g|o]
                 b_ref,       # (1, 4H)   f32   combined bias (b_ih + b_hh)
                 w_out_ref,   # (1, H)    f32   final linear weight row
                 b_out_ref,   # (1, 1)    f32   final linear bias
                 out_ref):    # (B, T)    f32
    B, T = out_ref.shape
    H4 = w_ih_ref.shape[1]
    H = H4 // 4   # fused-gate design assumes 4H == 128 (one full lane width)

    # ---- Hoisted input projection: one matmul, bias folded in (off critical path, f32). ----
    xw = jnp.dot(x_ref[...], w_ih_ref[...],
                 preferred_element_type=jnp.float32) + b_ref[...]      # (B*T, 4H)
    # (B*T, 4H) -> (B, T, 4H): each batch slab is exactly T=8 sublanes -> relayout-free.
    x3 = xw.reshape(B, T, H4)

    w_hh = w_hh_ref[...]        # (H, 4H) bf16, hoisted, reused by every unrolled step
    w_row = w_out_ref[...]      # (1, H)  f32

    # Loop-invariant lane mask selecting the g-gate lanes [2H, 3H) (hoisted: no CSE in-loop).
    lane = lax.broadcasted_iota(jnp.int32, (B, H4), 1)
    is_g = (lane >= 2 * H) & (lane < 3 * H)

    # Carries stay register-resident (no VMEM round-trip on the serial chain).
    h = jnp.zeros((B, H), jnp.float32)
    c = jnp.zeros((B, H), jnp.float32)

    ys = []
    for t in range(T):   # T static & small -> full unroll; LLO overlaps EUP/MXU across steps
        # Single fused recurrent matmul on the MXU: bf16 operands, f32 accumulate.
        gates = x3[:, t, :] + jnp.dot(h.astype(jnp.bfloat16), w_hh,
                                      preferred_element_type=jnp.float32)   # (B, 4H)

        # Two full-vreg EUP passes + lane-mask select instead of four sliced calls.
        act = jnp.where(is_g, jnp.tanh(gates), jax.nn.sigmoid(gates))
        i_g = act[:, 0:H]
        f_g = act[:, H:2 * H]
        g_g = act[:, 2 * H:3 * H]
        o_g = act[:, 3 * H:4 * H]

        c = f_g * c + i_g * g_g
        h = o_g * jnp.tanh(c)

        # Output projection on VPU/XLU (independent of the recurrence -> free filler).
        ys.append(jnp.sum(h * w_row, axis=-1, keepdims=True))               # (B, 1)

    # Lane-dense (B, T) output, one store.
    y = jnp.concatenate(ys, axis=1) + b_out_ref[...]                        # (B, T)
    out_ref[...] = y.astype(out_ref.dtype)


def lstm_forward(x, w_ih, w_hh, b_ih, b_hh, w_lin, b_lin):
    """x: (B, T, I) float32.  Returns (B, T, 1) float32 (matches the PyTorch module)."""
    B, T, I = x.shape
    H4 = w_ih.shape[0]
    H = H4 // 4
    assert H4 == 128, "fused-gate path assumes 4*hidden_size == 128 (one lane width)"

    # Repack PyTorch-convention parameters: fuse the 4 gates along the lane dim.
    w_ih_cat = w_ih.T.astype(jnp.float32)                  # (I, 4H) columns [i|f|g|o]
    w_hh_cat = w_hh.T.astype(jnp.bfloat16)                 # (H, 4H) bf16 MXU operand
    b_cat = (b_ih + b_hh).reshape(1, H4).astype(jnp.float32)
    w_out = w_lin.reshape(1, H).astype(jnp.float32)        # (1, H)
    b_out = b_lin.reshape(1, 1).astype(jnp.float32)        # (1, 1)

    # Natural (batch-major) flatten: row = b*T + t.  Pure reshape, no XLA transpose.
    x2d = x.reshape(B * T, I).astype(jnp.float32)

    vmem = pl.BlockSpec(memory_space=pltpu.MemorySpace.VMEM)
    out_bt = pl.pallas_call(
        _lstm_kernel,
        out_shape=jax.ShapeDtypeStruct((B, T), jnp.float32),
        in_specs=[vmem] * 6,
        out_specs=vmem,
    )(x2d, w_ih_cat, w_hh_cat, b_cat, w_out, b_out)

    # (B, T) -> (B, T, 1): free reshape, no transpose.
    return out_bt.reshape(B, T, 1)


def lstm_reference(x, w_ih, w_hh, b_ih, b_hh, w_lin, b_lin):
    """Pure-JAX f32 reference matching torch.nn.LSTM(batch_first=True) + Linear."""
    B, T, I = x.shape
    H = w_hh.shape[1]
    b = b_ih + b_hh

    def step(carry, x_t):
        h, c = carry
        gates = x_t @ w_ih.T + h @ w_hh.T + b            # (B, 4H)
        i = jax.nn.sigmoid(gates[:, 0:H])
        f = jax.nn.sigmoid(gates[:, H:2 * H])
        g = jnp.tanh(gates[:, 2 * H:3 * H])
        o = jax.nn.sigmoid(gates[:, 3 * H:4 * H])
        c_new = f * c + i * g
        h_new = o * jnp.tanh(c_new)
        return (h_new, c_new), h_new

    h0 = jnp.zeros((B, H), jnp.float32)
    c0 = jnp.zeros((B, H), jnp.float32)
    _, hs = lax.scan(step, (h0, c0), jnp.transpose(x, (1, 0, 2)))   # (T, B, H)
    hs = jnp.transpose(hs, (1, 0, 2))                               # (B, T, H)
    return hs @ w_lin.T + b_lin


if __name__ == "__main__":
    # Small shapes consistent with the module: input_size=16 -> hidden_size=32.
    B, T, I = 2, 8, 16
    H = int(np.floor(I * 2))   # 32  (so 4H = 128, one full lane dimension)

    key = jax.random.PRNGKey(0)
    kx, k1, k2, k3, k4, k5, k6 = jax.random.split(key, 7)

    x = jax.random.normal(kx, (B, T, I), dtype=jnp.float32)

    # Deterministic parameter init (PyTorch default: U(-1/sqrt(H), 1/sqrt(H))).
    s = 1.0 / np.sqrt(H)
    w_ih = jax.random.uniform(k1, (4 * H, I), jnp.float32, -s, s)
    w_hh = jax.random.uniform(k2, (4 * H, H), jnp.float32, -s, s)
    b_ih = jax.random.uniform(k3, (4 * H,), jnp.float32, -s, s)
    b_hh = jax.random.uniform(k4, (4 * H,), jnp.float32, -s, s)
    w_lin = jax.random.uniform(k5, (1, H), jnp.float32, -s, s)
    b_lin = jax.random.uniform(k6, (1,), jnp.float32, -s, s)

    out = lstm_forward(x, w_ih, w_hh, b_ih, b_hh, w_lin, b_lin)
    out = jax.block_until_ready(out)

    ref = lstm_reference(x, w_ih, w_hh, b_ih, b_hh, w_lin, b_lin)
    # Tolerance relaxed (vs 1e-5) because the recurrent matmul uses bf16 MXU operands
    # with f32 accumulation, per the performance review.
    np.testing.assert_allclose(np.asarray(out), np.asarray(ref), rtol=3e-2, atol=3e-2)

    assert out.shape == (B, T, 1)
    print("KERNEL_OK")
</pallas_src>

<mosaic_0001>
module attributes {stable_mosaic.version = 11 : i64} {
  func.func @_lstm_kernel(%arg0: memref<16x16xf32, #tpu.memory_space<vmem>>, %arg1: memref<16x128xf32, #tpu.memory_space<vmem>>, %arg2: memref<32x128xbf16, #tpu.memory_space<vmem>>, %arg3: memref<1x128xf32, #tpu.memory_space<vmem>>, %arg4: memref<1x32xf32, #tpu.memory_space<vmem>>, %arg5: memref<1x1xf32, #tpu.memory_space<vmem>>, %arg6: memref<2x8xf32, #tpu.memory_space<vmem>>) attributes {dimension_semantics = [], scalar_prefetch = 0 : i64, scratch_operands = 0 : i64, tpu.core_type = #tpu.core_type<tc>} {
    %c0 = arith.constant 0 : index
    %c0_0 = arith.constant 0 : index
    %0 = vector.load %arg0[%c0, %c0_0] : memref<16x16xf32, #tpu.memory_space<vmem>>, vector<16x16xf32>
    %c0_1 = arith.constant 0 : index
    %c0_2 = arith.constant 0 : index
    %1 = vector.load %arg1[%c0_1, %c0_2] : memref<16x128xf32, #tpu.memory_space<vmem>>, vector<16x128xf32>
    %cst = arith.constant dense<0.000000e+00> : vector<16x128xf32>
    %2 = tpu.matmul %0, %1, %cst {dimension_numbers = #tpu.dot_dimension_numbers<[1], [0], [0], [1], [0, 0, 1, 1], [], []>} : vector<16x16xf32>, vector<16x128xf32>, vector<16x128xf32> -> vector<16x128xf32>
    %c0_3 = arith.constant 0 : index
    %c0_4 = arith.constant 0 : index
    %3 = vector.load %arg3[%c0_3, %c0_4] : memref<1x128xf32, #tpu.memory_space<vmem>>, vector<1x128xf32>
    %4 = vector.broadcast %3 : vector<1x128xf32> to vector<16x128xf32>
    %5 = arith.addf %2, %4 : vector<16x128xf32>
    %6 = vector.shape_cast %5 : vector<16x128xf32> to vector<2x8x128xf32>
    %c0_5 = arith.constant 0 : index
    %c0_6 = arith.constant 0 : index
    %7 = vector.load %arg2[%c0_5, %c0_6] : memref<32x128xbf16, #tpu.memory_space<vmem>>, vector<32x128xbf16>
    %c0_7 = arith.constant 0 : index
    %c0_8 = arith.constant 0 : index
    %8 = vector.load %arg4[%c0_7, %c0_8] : memref<1x32xf32, #tpu.memory_space<vmem>>, vector<1x32xf32>
    %9 = tpu.iota {dimensions = array<i32: 1>} : vector<2x128xi32>
    %c64_i32 = arith.constant 64 : i32
    %10 = vector.broadcast %c64_i32 : i32 to vector<2x128xi32>
    %11 = arith.cmpi sge, %9, %10 : vector<2x128xi32>
    %c96_i32 = arith.constant 96 : i32
    %12 = vector.broadcast %c96_i32 : i32 to vector<2x128xi32>
    %13 = arith.cmpi slt, %9, %12 : vector<2x128xi32>
    %14 = arith.andi %11, %13 : vector<2x128xi1>
    %cst_9 = arith.constant 0.000000e+00 : f32
    %15 = vector.broadcast %cst_9 : f32 to vector<2x32xf32>
    %cst_10 = arith.constant 0.000000e+00 : f32
    %16 = vector.broadcast %cst_10 : f32 to vector<2x32xf32>
    %17 = vector.extract_strided_slice %6 {offsets = [0, 0, 0], sizes = [2, 1, 128], strides = [1, 1, 1]} : vector<2x8x128xf32> to vector<2x1x128xf32>
    %18 = vector.shape_cast %17 : vector<2x1x128xf32> to vector<2x128xf32>
    %19 = arith.truncf %15 : vector<2x32xf32> to vector<2x32xbf16>
    %cst_11 = arith.constant dense<0.000000e+00> : vector<2x128xf32>
    %20 = tpu.matmul %19, %7, %cst_11 {dimension_numbers = #tpu.dot_dimension_numbers<[1], [0], [0], [1], [0, 0, 1, 1], [], []>} : vector<2x32xbf16>, vector<32x128xbf16>, vector<2x128xf32> -> vector<2x128xf32>
    %21 = arith.addf %18, %20 : vector<2x128xf32>
    %22 = math.tanh %21 : vector<2x128xf32>
    %23 = arith.negf %21 : vector<2x128xf32>
    %24 = math.exp %23 : vector<2x128xf32>
    %cst_12 = arith.constant 1.000000e+00 : f32
    %25 = vector.broadcast %cst_12 : f32 to vector<2x128xf32>
    %26 = arith.addf %25, %24 : vector<2x128xf32>
    %27 = arith.divf %25, %26 : vector<2x128xf32>
    %28 = arith.select %14, %22, %27 : vector<2x128xi1>, vector<2x128xf32>
    %29 = vector.extract_strided_slice %28 {offsets = [0, 0], sizes = [2, 32], strides = [1, 1]} : vector<2x128xf32> to vector<2x32xf32>
    %30 = vector.extract_strided_slice %28 {offsets = [0, 32], sizes = [2, 32], strides = [1, 1]} : vector<2x128xf32> to vector<2x32xf32>
    %31 = vector.extract_strided_slice %28 {offsets = [0, 64], sizes = [2, 32], strides = [1, 1]} : vector<2x128xf32> to vector<2x32xf32>
    %32 = vector.extract_strided_slice %28 {offsets = [0, 96], sizes = [2, 32], strides = [1, 1]} : vector<2x128xf32> to vector<2x32xf32>
    %33 = arith.mulf %30, %16 : vector<2x32xf32>
    %34 = arith.mulf %29, %31 : vector<2x32xf32>
    %35 = arith.addf %33, %34 : vector<2x32xf32>
    %36 = math.tanh %35 : vector<2x32xf32>
    %37 = arith.mulf %32, %36 : vector<2x32xf32>
    %38 = vector.broadcast %8 : vector<1x32xf32> to vector<2x32xf32>
    %39 = arith.mulf %37, %38 : vector<2x32xf32>
    %cst_13 = arith.constant dense<0.000000e+00> : vector<2xf32>
    %40 = vector.multi_reduction <add>, %39, %cst_13 [1] : vector<2x32xf32> to vector<2xf32>
    %41 = vector.shape_cast %40 : vector<2xf32> to vector<2x1xf32>
    %42 = vector.extract_strided_slice %6 {offsets = [0, 1, 0], sizes = [2, 1, 128], strides = [1, 1, 1]} : vector<2x8x128xf32> to vector<2x1x128xf32>
    %43 = vector.shape_cast %42 : vector<2x1x128xf32> to vector<2x128xf32>
    %44 = arith.truncf %37 : vector<2x32xf32> to vector<2x32xbf16>
    %cst_14 = arith.constant dense<0.000000e+00> : vector<2x128xf32>
    %45 = tpu.matmul %44, %7, %cst_14 {dimension_numbers = #tpu.dot_dimension_numbers<[1], [0], [0], [1], [0, 0, 1, 1], [], []>} : vector<2x32xbf16>, vector<32x128xbf16>, vector<2x128xf32> -> vector<2x128xf32>
    %46 = arith.addf %43, %45 : vector<2x128xf32>
    %47 = math.tanh %46 : vector<2x128xf32>
    %48 = arith.negf %46 : vector<2x128xf32>
    %49 = math.exp %48 : vector<2x128xf32>
    %cst_15 = arith.constant 1.000000e+00 : f32
    %50 = vector.broadcast %cst_15 : f32 to vector<2x128xf32>
    %51 = arith.addf %50, %49 : vector<2x128xf32>
    %52 = arith.divf %50, %51 : vector<2x128xf32>
    %53 = arith.select %14, %47, %52 : vector<2x128xi1>, vector<2x128xf32>
    %54 = vector.extract_strided_slice %53 {offsets = [0, 0], sizes = [2, 32], strides = [1, 1]} : vector<2x128xf32> to vector<2x32xf32>
    %55 = vector.extract_strided_slice %53 {offsets = [0, 32], sizes = [2, 32], strides = [1, 1]} : vector<2x128xf32> to vector<2x32xf32>
    %56 = vector.extract_strided_slice %53 {offsets = [0, 64], sizes = [2, 32], strides = [1, 1]} : vector<2x128xf32> to vector<2x32xf32>
    %57 = vector.extract_strided_slice %53 {offsets = [0, 96], sizes = [2, 32], strides = [1, 1]} : vector<2x128xf32> to vector<2x32xf32>
    %58 = arith.mulf %55, %35 : vector<2x32xf32>
    %59 = arith.mulf %54, %56 : vector<2x32xf32>
    %60 = arith.addf %58, %59 : vector<2x32xf32>
    %61 = math.tanh %60 : vector<2x32xf32>
    %62 = arith.mulf %57, %61 : vector<2x32xf32>
    %63 = vector.broadcast %8 : vector<1x32xf32> to vector<2x32xf32>
    %64 = arith.mulf %62, %63 : vector<2x32xf32>
    %cst_16 = arith.constant dense<0.000000e+00> : vector<2xf32>
    %65 = vector.multi_reduction <add>, %64, %cst_16 [1] : vector<2x32xf32> to vector<2xf32>
    %66 = vector.shape_cast %65 : vector<2xf32> to vector<2x1xf32>
    %67 = vector.extract_strided_slice %6 {offsets = [0, 2, 0], sizes = [2, 1, 128], strides = [1, 1, 1]} : vector<2x8x128xf32> to vector<2x1x128xf32>
    %68 = vector.shape_cast %67 : vector<2x1x128xf32> to vector<2x128xf32>
    %69 = arith.truncf %62 : vector<2x32xf32> to vector<2x32xbf16>
    %cst_17 = arith.constant dense<0.000000e+00> : vector<2x128xf32>
    %70 = tpu.matmul %69, %7, %cst_17 {dimension_numbers = #tpu.dot_dimension_numbers<[1], [0], [0], [1], [0, 0, 1, 1], [], []>} : vector<2x32xbf16>, vector<32x128xbf16>, vector<2x128xf32> -> vector<2x128xf32>
    %71 = arith.addf %68, %70 : vector<2x128xf32>
    %72 = math.tanh %71 : vector<2x128xf32>
    %73 = arith.negf %71 : vector<2x128xf32>
    %74 = math.exp %73 : vector<2x128xf32>
    %cst_18 = arith.constant 1.000000e+00 : f32
    %75 = vector.broadcast %cst_18 : f32 to vector<2x128xf32>
    %76 = arith.addf %75, %74 : vector<2x128xf32>
    %77 = arith.divf %75, %76 : vector<2x128xf32>
    %78 = arith.select %14, %72, %77 : vector<2x128xi1>, vector<2x128xf32>
    %79 = vector.extract_strided_slice %78 {offsets = [0, 0], sizes = [2, 32], strides = [1, 1]} : vector<2x128xf32> to vector<2x32xf32>
    %80 = vector.extract_strided_slice %78 {offsets = [0, 32], sizes = [2, 32], strides = [1, 1]} : vector<2x128xf32> to vector<2x32xf32>
    %81 = vector.extract_strided_slice %78 {offsets = [0, 64], sizes = [2, 32], strides = [1, 1]} : vector<2x128xf32> to vector<2x32xf32>
    %82 = vector.extract_strided_slice %78 {offsets = [0, 96], sizes = [2, 32], strides = [1, 1]} : vector<2x128xf32> to vector<2x32xf32>
    %83 = arith.mulf %80, %60 : vector<2x32xf32>
    %84 = arith.mulf %79, %81 : vector<2x32xf32>
    %85 = arith.addf %83, %84 : vector<2x32xf32>
    %86 = math.tanh %85 : vector<2x32xf32>
    %87 = arith.mulf %82, %86 : vector<2x32xf32>
    %88 = vector.broadcast %8 : vector<1x32xf32> to vector<2x32xf32>
    %89 = arith.mulf %87, %88 : vector<2x32xf32>
    %cst_19 = arith.constant dense<0.000000e+00> : vector<2xf32>
    %90 = vector.multi_reduction <add>, %89, %cst_19 [1] : vector<2x32xf32> to vector<2xf32>
    %91 = vector.shape_cast %90 : vector<2xf32> to vector<2x1xf32>
    %92 = vector.extract_strided_slice %6 {offsets = [0, 3, 0], sizes = [2, 1, 128], strides = [1, 1, 1]} : vector<2x8x128xf32> to vector<2x1x128xf32>
    %93 = vector.shape_cast %92 : vector<2x1x128xf32> to vector<2x128xf32>
    %94 = arith.truncf %87 : vector<2x32xf32> to vector<2x32xbf16>
    %cst_20 = arith.constant dense<0.000000e+00> : vector<2x128xf32>
    %95 = tpu.matmul %94, %7, %cst_20 {dimension_numbers = #tpu.dot_dimension_numbers<[1], [0], [0], [1], [0, 0, 1, 1], [], []>} : vector<2x32xbf16>, vector<32x128xbf16>, vector<2x128xf32> -> vector<2x128xf32>
    %96 = arith.addf %93, %95 : vector<2x128xf32>
    %97 = math.tanh %96 : vector<2x128xf32>
    %98 = arith.negf %96 : vector<2x128xf32>
    %99 = math.exp %98 : vector<2x128xf32>
    %cst_21 = arith.constant 1.000000e+00 : f32
    %100 = vector.broadcast %cst_21 : f32 to vector<2x128xf32>
    %101 = arith.addf %100, %99 : vector<2x128xf32>
    %102 = arith.divf %100, %101 : vector<2x128xf32>
    %103 = arith.select %14, %97, %102 : vector<2x128xi1>, vector<2x128xf32>
    %104 = vector.extract_strided_slice %103 {offsets = [0, 0], sizes = [2, 32], strides = [1, 1]} : vector<2x128xf32> to vector<2x32xf32>
    %105 = vector.extract_strided_slice %103 {offsets = [0, 32], sizes = [2, 32], strides = [1, 1]} : vector<2x128xf32> to vector<2x32xf32>
    %106 = vector.extract_strided_slice %103 {offsets = [0, 64], sizes = [2, 32], strides = [1, 1]} : vector<2x128xf32> to vector<2x32xf32>
    %107 = vector.extract_strided_slice %103 {offsets = [0, 96], sizes = [2, 32], strides = [1, 1]} : vector<2x128xf32> to vector<2x32xf32>
    %108 = arith.mulf %105, %85 : vector<2x32xf32>
    %109 = arith.mulf %104, %106 : vector<2x32xf32>
    %110 = arith.addf %108, %109 : vector<2x32xf32>
    %111 = math.tanh %110 : vector<2x32xf32>
    %112 = arith.mulf %107, %111 : vector<2x32xf32>
    %113 = vector.broadcast %8 : vector<1x32xf32> to vector<2x32xf32>
    %114 = arith.mulf %112, %113 : vector<2x32xf32>
    %cst_22 = arith.constant dense<0.000000e+00> : vector<2xf32>
    %115 = vector.multi_reduction <add>, %114, %cst_22 [1] : vector<2x32xf32> to vector<2xf32>
    %116 = vector.shape_cast %115 : vector<2xf32> to vector<2x1xf32>
    %117 = vector.extract_strided_slice %6 {offsets = [0, 4, 0], sizes = [2, 1, 128], strides = [1, 1, 1]} : vector<2x8x128xf32> to vector<2x1x128xf32>
    %118 = vector.shape_cast %117 : vector<2x1x128xf32> to vector<2x128xf32>
    %119 = arith.truncf %112 : vector<2x32xf32> to vector<2x32xbf16>
    %cst_23 = arith.constant dense<0.000000e+00> : vector<2x128xf32>
    %120 = tpu.matmul %119, %7, %cst_23 {dimension_numbers = #tpu.dot_dimension_numbers<[1], [0], [0], [1], [0, 0, 1, 1], [], []>} : vector<2x32xbf16>, vector<32x128xbf16>, vector<2x128xf32> -> vector<2x128xf32>
    %121 = arith.addf %118, %120 : vector<2x128xf32>
    %122 = math.tanh %121 : vector<2x128xf32>
    %123 = arith.negf %121 : vector<2x128xf32>
    %124 = math.exp %123 : vector<2x128xf32>
    %cst_24 = arith.constant 1.000000e+00 : f32
    %125 = vector.broadcast %cst_24 : f32 to vector<2x128xf32>
    %126 = arith.addf %125, %124 : vector<2x128xf32>
    %127 = arith.divf %125, %126 : vector<2x128xf32>
    %128 = arith.select %14, %122, %127 : vector<2x128xi1>, vector<2x128xf32>
    %129 = vector.extract_strided_slice %128 {offsets = [0, 0], sizes = [2, 32], strides = [1, 1]} : vector<2x128xf32> to vector<2x32xf32>
    %130 = vector.extract_strided_slice %128 {offsets = [0, 32], sizes = [2, 32], strides = [1, 1]} : vector<2x128xf32> to vector<2x32xf32>
    %131 = vector.extract_strided_slice %128 {offsets = [0, 64], sizes = [2, 32], strides = [1, 1]} : vector<2x128xf32> to vector<2x32xf32>
    %132 = vector.extract_strided_slice %128 {offsets = [0, 96], sizes = [2, 32], strides = [1, 1]} : vector<2x128xf32> to vector<2x32xf32>
    %133 = arith.mulf %130, %110 : vector<2x32xf32>
    %134 = arith.mulf %129, %131 : vector<2x32xf32>
    %135 = arith.addf %133, %134 : vector<2x32xf32>
    %136 = math.tanh %135 : vector<2x32xf32>
    %137 = arith.mulf %132, %136 : vector<2x32xf32>
    %138 = vector.broadcast %8 : vector<1x32xf32> to vector<2x32xf32>
    %139 = arith.mulf %137, %138 : vector<2x32xf32>
    %cst_25 = arith.constant dense<0.000000e+00> : vector<2xf32>
    %140 = vector.multi_reduction <add>, %139, %cst_25 [1] : vector<2x32xf32> to vector<2xf32>
    %141 = vector.shape_cast %140 : vector<2xf32> to vector<2x1xf32>
    %142 = vector.extract_strided_slice %6 {offsets = [0, 5, 0], sizes = [2, 1, 128], strides = [1, 1, 1]} : vector<2x8x128xf32> to vector<2x1x128xf32>
    %143 = vector.shape_cast %142 : vector<2x1x128xf32> to vector<2x128xf32>
    %144 = arith.truncf %137 : vector<2x32xf32> to vector<2x32xbf16>
    %cst_26 = arith.constant dense<0.000000e+00> : vector<2x128xf32>
    %145 = tpu.matmul %144, %7, %cst_26 {dimension_numbers = #tpu.dot_dimension_numbers<[1], [0], [0], [1], [0, 0, 1, 1], [], []>} : vector<2x32xbf16>, vector<32x128xbf16>, vector<2x128xf32> -> vector<2x128xf32>
    %146 = arith.addf %143, %145 : vector<2x128xf32>
    %147 = math.tanh %146 : vector<2x128xf32>
    %148 = arith.negf %146 : vector<2x128xf32>
    %149 = math.exp %148 : vector<2x128xf32>
    %cst_27 = arith.constant 1.000000e+00 : f32
    %150 = vector.broadcast %cst_27 : f32 to vector<2x128xf32>
    %151 = arith.addf %150, %149 : vector<2x128xf32>
    %152 = arith.divf %150, %151 : vector<2x128xf32>
    %153 = arith.select %14, %147, %152 : vector<2x128xi1>, vector<2x128xf32>
    %154 = vector.extract_strided_slice %153 {offsets = [0, 0], sizes = [2, 32], strides = [1, 1]} : vector<2x128xf32> to vector<2x32xf32>
    %155 = vector.extract_strided_slice %153 {offsets = [0, 32], sizes = [2, 32], strides = [1, 1]} : vector<2x128xf32> to vector<2x32xf32>
    %156 = vector.extract_strided_slice %153 {offsets = [0, 64], sizes = [2, 32], strides = [1, 1]} : vector<2x128xf32> to vector<2x32xf32>
    %157 = vector.extract_strided_slice %153 {offsets = [0, 96], sizes = [2, 32], strides = [1, 1]} : vector<2x128xf32> to vector<2x32xf32>
    %158 = arith.mulf %155, %135 : vector<2x32xf32>
    %159 = arith.mulf %154, %156 : vector<2x32xf32>
    %160 = arith.addf %158, %159 : vector<2x32xf32>
    %161 = math.tanh %160 : vector<2x32xf32>
    %162 = arith.mulf %157, %161 : vector<2x32xf32>
    %163 = vector.broadcast %8 : vector<1x32xf32> to vector<2x32xf32>
    %164 = arith.mulf %162, %163 : vector<2x32xf32>
    %cst_28 = arith.constant dense<0.000000e+00> : vector<2xf32>
    %165 = vector.multi_reduction <add>, %164, %cst_28 [1] : vector<2x32xf32> to vector<2xf32>
    %166 = vector.shape_cast %165 : vector<2xf32> to vector<2x1xf32>
    %167 = vector.extract_strided_slice %6 {offsets = [0, 6, 0], sizes = [2, 1, 128], strides = [1, 1, 1]} : vector<2x8x128xf32> to vector<2x1x128xf32>
    %168 = vector.shape_cast %167 : vector<2x1x128xf32> to vector<2x128xf32>
    %169 = arith.truncf %162 : vector<2x32xf32> to vector<2x32xbf16>
    %cst_29 = arith.constant dense<0.000000e+00> : vector<2x128xf32>
    %170 = tpu.matmul %169, %7, %cst_29 {dimension_numbers = #tpu.dot_dimension_numbers<[1], [0], [0], [1], [0, 0, 1, 1], [], []>} : vector<2x32xbf16>, vector<32x128xbf16>, vector<2x128xf32> -> vector<2x128xf32>
    %171 = arith.addf %168, %170 : vector<2x128xf32>
    %172 = math.tanh %171 : vector<2x128xf32>
    %173 = arith.negf %171 : vector<2x128xf32>
    %174 = math.exp %173 : vector<2x128xf32>
    %cst_30 = arith.constant 1.000000e+00 : f32
    %175 = vector.broadcast %cst_30 : f32 to vector<2x128xf32>
    %176 = arith.addf %175, %174 : vector<2x128xf32>
    %177 = arith.divf %175, %176 : vector<2x128xf32>
    %178 = arith.select %14, %172, %177 : vector<2x128xi1>, vector<2x128xf32>
    %179 = vector.extract_strided_slice %178 {offsets = [0, 0], sizes = [2, 32], strides = [1, 1]} : vector<2x128xf32> to vector<2x32xf32>
    %180 = vector.extract_strided_slice %178 {offsets = [0, 32], sizes = [2, 32], strides = [1, 1]} : vector<2x128xf32> to vector<2x32xf32>
    %181 = vector.extract_strided_slice %178 {offsets = [0, 64], sizes = [2, 32], strides = [1, 1]} : vector<2x128xf32> to vector<2x32xf32>
    %182 = vector.extract_strided_slice %178 {offsets = [0, 96], sizes = [2, 32], strides = [1, 1]} : vector<2x128xf32> to vector<2x32xf32>
    %183 = arith.mulf %180, %160 : vector<2x32xf32>
    %184 = arith.mulf %179, %181 : vector<2x32xf32>
    %185 = arith.addf %183, %184 : vector<2x32xf32>
    %186 = math.tanh %185 : vector<2x32xf32>
    %187 = arith.mulf %182, %186 : vector<2x32xf32>
    %188 = vector.broadcast %8 : vector<1x32xf32> to vector<2x32xf32>
    %189 = arith.mulf %187, %188 : vector<2x32xf32>
    %cst_31 = arith.constant dense<0.000000e+00> : vector<2xf32>
    %190 = vector.multi_reduction <add>, %189, %cst_31 [1] : vector<2x32xf32> to vector<2xf32>
    %191 = vector.shape_cast %190 : vector<2xf32> to vector<2x1xf32>
    %192 = vector.extract_strided_slice %6 {offsets = [0, 7, 0], sizes = [2, 1, 128], strides = [1, 1, 1]} : vector<2x8x128xf32> to vector<2x1x128xf32>
    %193 = vector.shape_cast %192 : vector<2x1x128xf32> to vector<2x128xf32>
    %194 = arith.truncf %187 : vector<2x32xf32> to vector<2x32xbf16>
    %cst_32 = arith.constant dense<0.000000e+00> : vector<2x128xf32>
    %195 = tpu.matmul %194, %7, %cst_32 {dimension_numbers = #tpu.dot_dimension_numbers<[1], [0], [0], [1], [0, 0, 1, 1], [], []>} : vector<2x32xbf16>, vector<32x128xbf16>, vector<2x128xf32> -> vector<2x128xf32>
    %196 = arith.addf %193, %195 : vector<2x128xf32>
    %197 = math.tanh %196 : vector<2x128xf32>
    %198 = arith.negf %196 : vector<2x128xf32>
    %199 = math.exp %198 : vector<2x128xf32>
    %cst_33 = arith.constant 1.000000e+00 : f32
    %200 = vector.broadcast %cst_33 : f32 to vector<2x128xf32>
    %201 = arith.addf %200, %199 : vector<2x128xf32>
    %202 = arith.divf %200, %201 : vector<2x128xf32>
    %203 = arith.select %14, %197, %202 : vector<2x128xi1>, vector<2x128xf32>
    %204 = vector.extract_strided_slice %203 {offsets = [0, 0], sizes = [2, 32], strides = [1, 1]} : vector<2x128xf32> to vector<2x32xf32>
    %205 = vector.extract_strided_slice %203 {offsets = [0, 32], sizes = [2, 32], strides = [1, 1]} : vector<2x128xf32> to vector<2x32xf32>
    %206 = vector.extract_strided_slice %203 {offsets = [0, 64], sizes = [2, 32], strides = [1, 1]} : vector<2x128xf32> to vector<2x32xf32>
    %207 = vector.extract_strided_slice %203 {offsets = [0, 96], sizes = [2, 32], strides = [1, 1]} : vector<2x128xf32> to vector<2x32xf32>
    %208 = arith.mulf %205, %185 : vector<2x32xf32>
    %209 = arith.mulf %204, %206 : vector<2x32xf32>
    %210 = arith.addf %208, %209 : vector<2x32xf32>
    %211 = math.tanh %210 : vector<2x32xf32>
    %212 = arith.mulf %207, %211 : vector<2x32xf32>
    %213 = vector.broadcast %8 : vector<1x32xf32> to vector<2x32xf32>
    %214 = arith.mulf %212, %213 : vector<2x32xf32>
    %cst_34 = arith.constant dense<0.000000e+00> : vector<2xf32>
    %215 = vector.multi_reduction <add>, %214, %cst_34 [1] : vector<2x32xf32> to vector<2xf32>
    %216 = vector.shape_cast %215 : vector<2xf32> to vector<2x1xf32>
    %217 = tpu.concatenate %41, %66, %91, %116, %141, %166, %191, %216 in 1 : vector<2x1xf32>, vector<2x1xf32>, vector<2x1xf32>, vector<2x1xf32>, vector<2x1xf32>, vector<2x1xf32>, vector<2x1xf32>, vector<2x1xf32> -> vector<2x8xf32>
    %c0_35 = arith.constant 0 : index
    %c0_36 = arith.constant 0 : index
    %218 = vector.load %arg5[%c0_35, %c0_36] : memref<1x1xf32, #tpu.memory_space<vmem>>, vector<1x1xf32>
    %219 = vector.broadcast %218 : vector<1x1xf32> to vector<2x8xf32>
    %220 = arith.addf %217, %219 : vector<2x8xf32>
    %c0_37 = arith.constant 0 : index
    %c0_38 = arith.constant 0 : index
    %221 = vector.load %arg6[%c0_37, %c0_38] : memref<2x8xf32, #tpu.memory_space<vmem>>, vector<2x8xf32>
    tpu.vector_store %arg6[%c0_37, %c0_38], %220 {strides = array<i32>} : memref<2x8xf32, #tpu.memory_space<vmem>>, vector<2x8xf32>,
    return
  }
}

</mosaic_0001>

<llo_original>
// kernel: tpu_custom_call.1
$region0: #{tpu_custom_call.1}
  #allocation0 [shape = 'u32[]', space=smem, size = 0x4, offset = 0x4, fixed_abs, tag = 'smem constant byte address 0x4 - core index']
  #allocation1 [shape = 'u32[144,128]{1,0:T(1,128)}', space=vmem, size = 0x12000, scoped, tag = 'internal scratch']
  #allocation2 [shape = 'f32[1,1]{1,0:T(1,128)S(1)}', space=vmem, size = 0x200, scoped, tag = 'scoped memory for tpu_custom_call.1']
  %s0 = inlined_call_operand.hbm [shape: f32[16,16], index: 0, kind: input, shape index: {}]
  %s1 = inlined_call_operand.hbm [shape: f32[16,128], index: 1, kind: input, shape index: {}]
  %s2 = inlined_call_operand.hbm [shape: bf16[32,128], index: 2, kind: input, shape index: {}]
  %s3 = inlined_call_operand.vmem [shape: f32[1,128], index: 3, kind: input, shape index: {}]
  %s4 = inlined_call_operand.vmem [shape: f32[1,32], index: 4, kind: input, shape index: {}]
  %s5 = inlined_call_operand.<no memory space> [shape: f32[1,1], index: 5, kind: input, shape index: {}]
  %s6 = inlined_call_operand.hbm [shape: f32[2,8], index: 6, kind: output, shape index: {}]
  %s7 = sld [smem:[#allocation0]]
  $region46: #{tpu_custom_call.1} parent=0
    _
  %s9 = ssub.s32 1, %s7
  %s10 = scalar_select 0, %s9, %s7
  %v11 = vstv %s5
  %12 = vst [vmem:[#allocation2] sm:$0x1] %v11
  $region1: #{tpu_custom_call.1} parent=0
    #allocation3 [shape = 'u8[8192]{0}', space=vmem, size = 0x2000, scoped, tag = 'input window, operand 0, single buffered']
    #allocation4 [shape = 's32[1]{0}', space=sflag, size = 0x4, scoped, tag = 'scoped memory for tpu_custom_call.1']
    #allocation5 [shape = 's32[1]{0}', space=sflag, size = 0x4, scoped, tag = 'scoped memory for tpu_custom_call.1']
    #allocation6 [shape = 'u8[8192]{0}', space=vmem, size = 0x2000, scoped, tag = 'input window, operand 1, single buffered']
    #allocation7 [shape = 's32[1]{0}', space=sflag, size = 0x4, scoped, tag = 'scoped memory for tpu_custom_call.1']
    #allocation8 [shape = 'u8[8192]{0}', space=vmem, size = 0x2000, scoped, tag = 'input window, operand 2, single buffered']
    #allocation9 [shape = 'u8[1024]{0}', space=vmem, size = 0x400, scoped, tag = 'output window, operand 0, single buffered']
    %13 = vsyncpa [#allocation4], 0
    %14 = vsyncpa [#allocation7], 0
    %15 = vsyncpa [#allocation5], 0
    // Predicated region
    $region2: #{tpu_custom_call.1} parent=1 // pred_check
      _
    $region3: #{tpu_custom_call.1} parent=1 // pred_check_branch
      %17 = sbr.rel (0) target = $region5
    $region4: #{tpu_custom_call.1} parent=1 // pred_region
      %s19 = ssub.s32 256, 256
      %20 = vsyncadd [#allocation4], %s19
      %s21 = sshll.u32 [#allocation3], 4
      %s22 = int_to_ptr.vmem [resolvable:$true] %s21
      %27 = dma.hbm_to_vmem [thread:$0]  %s0, 256, %s22, [#allocation4], 128, 128, 8
    $region5: #{tpu_custom_call.1} parent=1 // pred_fallthru
      _
    // Predicated region
    $region6: #{tpu_custom_call.1} parent=1 // pred_check
      _
    $region7: #{tpu_custom_call.1} parent=1 // pred_check_branch
      %29 = sbr.rel (0) target = $region9
    $region8: #{tpu_custom_call.1} parent=1 // pred_region
      %s31 = ssub.s32 256, 256
      %32 = vsyncadd [#allocation7], %s31
      %s33 = sshll.u32 [#allocation6], 4
      %s34 = int_to_ptr.vmem [resolvable:$true] %s33
      %39 = dma.hbm_to_vmem [thread:$0]  %s1, 256, %s34, [#allocation7], 128, 128, 8
    $region9: #{tpu_custom_call.1} parent=1 // pred_fallthru
      _
    // Predicated region
    $region10: #{tpu_custom_call.1} parent=1 // pred_check
      _
    $region11: #{tpu_custom_call.1} parent=1 // pred_check_branch
      %41 = sbr.rel (0) target = $region13
    $region12: #{tpu_custom_call.1} parent=1 // pred_region
      %s43 = ssub.s32 256, 256
      %44 = vsyncadd [#allocation7], %s43
      %s45 = sshll.u32 [#allocation8], 4
      %s46 = int_to_ptr.vmem [resolvable:$true] %s45
      %51 = dma.hbm_to_vmem [thread:$0]  %s2, 256, %s46, [#allocation7], 64, 64, 4
    $region13: #{tpu_custom_call.1} parent=1 // pred_fallthru
      _
    // Predicated region
    $region14: #{tpu_custom_call.1} parent=1 // pred_check
      _
    $region15: #{tpu_custom_call.1} parent=1 // pred_check_branch
      %53 = sbr.rel (0) target = $region17
    $region16: #{tpu_custom_call.1} parent=1 // pred_region
      _
    $region17: #{tpu_custom_call.1} parent=1 // pred_fallthru
      _
    // Predicated region
    $region18: #{tpu_custom_call.1} parent=1 // pred_check
      _
    $region19: #{tpu_custom_call.1} parent=1 // pred_check_branch
      %55 = sbr.rel (0) target = $region21
    $region20: #{tpu_custom_call.1} parent=1 // pred_region
      _
    $region21: #{tpu_custom_call.1} parent=1 // pred_fallthru
      _
    // Predicated region
    $region22: #{tpu_custom_call.1} parent=1 // pred_check
      _
    $region23: #{tpu_custom_call.1} parent=1 // pred_check_branch
      %57 = sbr.rel (0) target = $region25
    $region24: #{tpu_custom_call.1} parent=1 // pred_region
      _
    $region25: #{tpu_custom_call.1} parent=1 // pred_fallthru
      _
    // Predicated region
    $region26: #{tpu_custom_call.1} parent=1 // pred_check
      _
    $region27: #{tpu_custom_call.1} parent=1 // pred_check_branch
      %59 = sbr.rel (0) target = $region29
    $region28: #{tpu_custom_call.1} parent=1 // pred_region
      %60 = dma.done [#allocation4], 256
    $region29: #{tpu_custom_call.1} parent=1 // pred_fallthru
      _
    // Predicated region
    $region30: #{tpu_custom_call.1} parent=1 // pred_check
      _
    $region31: #{tpu_custom_call.1} parent=1 // pred_check_branch
      %62 = sbr.rel (0) target = $region33
    $region32: #{tpu_custom_call.1} parent=1 // pred_region
      %63 = dma.done [#allocation7], 256
    $region33: #{tpu_custom_call.1} parent=1 // pred_fallthru
      _
    // Predicated region
    $region34: #{tpu_custom_call.1} parent=1 // pred_check
      _
    $region35: #{tpu_custom_call.1} parent=1 // pred_check_branch
      %65 = sbr.rel (0) target = $region37
    $region36: #{tpu_custom_call.1} parent=1 // pred_region
      %66 = dma.done [#allocation7], 256
    $region37: #{tpu_custom_call.1} parent=1 // pred_fallthru
      _
    %v68 = vld [vmem:[#allocation3] sm:$0xff]
    %v69 = vld [vmem:[#allocation3 + $0x8] sm:$0xff]
    %v70 = vld [vmem:[#allocation6] sm:$0xff]
    %v71 = vld [vmem:[#allocation6 + $0x8] sm:$0xff]
    %v72 = vld [vmem:[%s3] sm:$0x1]
    %v74 = vlaneseq
    %v75 = vshrl.u32 %v74, 7
    %v76 = vsub.s32 0, %v75
    %v77 = vrot.slane %v72, %v76
    %vm79 = vcmask 130048
    %v81 = vsel %vm79, %v68, 0
    %v84 = vsel %vm79, %v69, 0
    %86 = vmatprep.subr.mxu0 0.0
    %87 = vmatpush1.msra.mxu0 %v70
    %88 = vmatprep.subr.mxu0 0.0
    %89 = vmatpush1.msra.mxu0 %v71
    %90 = vmatprep.subr.mxu0 0.0
    %91 = vmatpush1.msra.mxu0 0.0
    %92 = vmatprep.subr.mxu0 0.0
    %93 = vmatpush1.msra.mxu0 0.0
    %94 = vmatprep.subr.mxu0 0.0
    %95 = vmatpush1.msra.mxu0 0.0
    %96 = vmatprep.subr.mxu0 0.0
    %97 = vmatpush1.msra.mxu0 0.0
    %98 = vmatprep.subr.mxu0 0.0
    %99 = vmatpush1.msra.mxu0 0.0
    %100 = vmatprep.subr.mxu0 0.0
    %101 = vmatpush1.msra.mxu0 0.0
    %102 = vmatprep.subr.mxu0 0.0
    %103 = vmatpush1.msra.mxu0 0.0
    %104 = vmatprep.subr.mxu0 0.0
    %105 = vmatpush1.msra.mxu0 0.0
    %106 = vmatprep.subr.mxu0 0.0
    %107 = vmatpush1.msra.mxu0 0.0
    %108 = vmatprep.subr.mxu0 0.0
    %109 = vmatpush1.msra.mxu0 0.0
    %110 = vmatprep.subr.mxu0 0.0
    %111 = vmatpush1.msra.mxu0 0.0
    %112 = vmatprep.subr.mxu0 0.0
    %113 = vmatpush1.msra.mxu0 0.0
    %114 = vmatprep.subr.mxu0 0.0
    %115 = vmatpush1.msra.mxu0 0.0
    %116 = vmatprep.subr.mxu0 0.0
    %117 = vmatpush1.msra.mxu0 0.0
    %118 = vmatprep.subr.mxu0 0.0
    %119 = vmatpush1.msra.mxu0 0.0
    %120 = vmatprep.subr.mxu0 0.0
    %121 = vmatpush1.msra.mxu0 0.0
    %122 = vmatprep.subr.mxu0 0.0
    %123 = vmatpush1.msra.mxu0 0.0
    %124 = vmatprep.subr.mxu0 0.0
    %125 = vmatpush1.msra.mxu0 0.0
    %126 = vmatprep.subr.mxu0 0.0
    %127 = vmatpush1.msra.mxu0 0.0
    %128 = vmatprep.subr.mxu0 0.0
    %129 = vmatpush1.msra.mxu0 0.0
    %130 = vmatprep.subr.mxu0 0.0
    %131 = vmatpush1.msra.mxu0 0.0
    %132 = vmatprep.subr.mxu0 0.0
    %133 = vmatpush1.msra.mxu0 0.0
    %134 = vmatprep.subr.mxu0 0.0
    %135 = vmatpush1.msra.mxu0 0.0
    %136 = vmatprep.subr.mxu0 0.0
    %137 = vmatpush1.msra.mxu0 0.0
    %138 = vmatprep.subr.mxu0 0.0
    %139 = vmatpush1.msra.mxu0 0.0
    %140 = vmatprep.subr.mxu0 0.0
    %141 = vmatpush1.msra.mxu0 0.0
    %142 = vmatprep.subr.mxu0 0.0
    %143 = vmatpush1.msra.mxu0 0.0
    %144 = vmatprep.subr.mxu0 0.0
    %145 = vmatpush1.msra.mxu0 0.0
    %146 = vmatprep.subr.mxu0 0.0
    %147 = vmatpush1.msra.mxu0 0.0
    %148 = vmatprep.subr.mxu0 0.0
    %149 = vmatpush1.msra.mxu0 0.0
    %150 = vmatprep.mubr.f32.mxu0 0.0
    %151 = vmatmul.mubr.f32.gmra.mrb[0].mxu0 %v81
    %v152 = vpop.f32.mrb[0].mxu0
    %v153 = vadd.f32 %v77, %v152
    %v154 = vpop.f32.mrb[0].mxu0
    %155 = vmatprep.mubr.f32.mxu0 0.0
    %156 = vmatmul.mubr.f32.gmra.mrb[0].mxu0 %v84
    %v157 = vpop.f32.mrb[0].mxu0
    %v158 = vadd.f32 %v77, %v157
    %v159 = vpop.f32.mrb[0].mxu0
    %160 = vdwg.mxu0
    %v161 = vld [vmem:[#allocation8] sm:$0xf]
    %v162 = vld [vmem:[#allocation8 + $0x4] sm:$0xf]
    %v163 = vld [vmem:[#allocation8 + $0x8] sm:$0xf]
    %v164 = vld [vmem:[#allocation8 + $0xc] sm:$0xf]
    %v165 = vld [vmem:[%s4] sm:$0x1]
    %v166 = vlaneseq
    %v167 = vand.u32 %v166, 127
    %vm168 = vcmp.ge.s32.totalorder %v167, 64
    %vm169 = vcmp.lt.s32.totalorder %v167, 96
    %vm170 = vmand %vm168, %vm169
    %v175 = vunpack.c.l.b16 %v161
    %v176 = vunpack.c.l.b16 %v162
    %v177 = vunpack.c.l.b16 %v163
    %v178 = vunpack.c.l.b16 %v164
    %v179 = vpack.c.b16 %v176, %v175
    %v180 = vpack.c.b16 %v178, %v177
    %vm183 = vcmask 261120
    %v185 = vsel %vm183, 0, 0
    %187 = vmatprep.subr.bf16.mxu0 0
    %188 = vmatpush1.bf16.msra.mxu0 %v179
    %189 = vmatprep.subr.bf16.mxu0 0
    %190 = vmatpush1.bf16.msra.mxu0 %v180
    %191 = vmatprep.subr.bf16.mxu0 0
    %192 = vmatpush1.bf16.msra.mxu0 0
    %193 = vmatprep.subr.bf16.mxu0 0
    %194 = vmatpush1.bf16.msra.mxu0 0
    %195 = vmatprep.subr.bf16.mxu0 0
    %196 = vmatpush1.bf16.msra.mxu0 0
    %197 = vmatprep.subr.bf16.mxu0 0
    %198 = vmatpush1.bf16.msra.mxu0 0
    %199 = vmatprep.subr.bf16.mxu0 0
    %200 = vmatpush1.bf16.msra.mxu0 0
    %201 = vmatprep.subr.bf16.mxu0 0
    %202 = vmatpush1.bf16.msra.mxu0 0
    %203 = vmatprep.subr.bf16.mxu0 0
    %204 = vmatpush1.bf16.msra.mxu0 0
    %205 = vmatprep.subr.bf16.mxu0 0
    %206 = vmatpush1.bf16.msra.mxu0 0
    %207 = vmatprep.subr.bf16.mxu0 0
    %208 = vmatpush1.bf16.msra.mxu0 0
    %209 = vmatprep.subr.bf16.mxu0 0
    %210 = vmatpush1.bf16.msra.mxu0 0
    %211 = vmatprep.subr.bf16.mxu0 0
    %212 = vmatpush1.bf16.msra.mxu0 0
    %213 = vmatprep.subr.bf16.mxu0 0
    %214 = vmatpush1.bf16.msra.mxu0 0
    %215 = vmatprep.subr.bf16.mxu0 0
    %216 = vmatpush1.bf16.msra.mxu0 0
    %217 = vmatprep.subr.bf16.mxu0 0
    %218 = vmatpush1.bf16.msra.mxu0 0
    %219 = vmatprep.mubr.bf16.mxu0 0
    %220 = vmatmul.mubr.bf16.gmra.mrb[0].mxu0 %v185
    %v221 = vpop.f32.mrb[0].mxu0
    %v222 = vadd.f32 0.0, %v221
    %v223 = vpop.f32.mrb[0].mxu0
    %v224 = vpop.f32.mrb[0].mxu0
    %v225 = vpop.f32.mrb[0].mxu0
    %226 = vdwg.mxu0
    %v228 = vrot.slane %v222, 1
    %v231 = vadd.f32 %v153, %v222
    %v232 = vadd.f32 %v158, %v228
    %v233 = vtanh.pop %v231
    %v234 = vtanh.pop %v232
    %v235 = vxor.u32 %v231, 2147483648
    %v236 = vxor.u32 %v232, 2147483648
    %v237 = vmul.f32 %v235, 1.442695
    %v238 = vpow.pop %v237
    %v239 = vmul.f32 %v236, 1.442695
    %v240 = vpow.pop %v239
    %v241 = vadd.f32 %v238, 1.0
    %v242 = vadd.f32 %v240, 1.0
    %v243 = vrcp.pop %v241
    %v244 = vmul.f32 1.0, %v243
    %v245 = vrcp.pop %v242
    %v246 = vmul.f32 1.0, %v245
    %v249 = vrot.slane %v234, 7
    %vm250 = vcmask 1041409
    %v251 = vsel %vm250, %v249, %v233
    %v255 = vrot.slane %v246, 7
    %v256 = vsel %vm250, %v255, %v244
    %v258 = vsel %vm170, %v251, %v256
    %v259 = vmul.f32 %v258, 0.0
    %261 = vrot.lane.b32.xlu0 %v258, 64
    %v262 = vpop.permute.xlu0 %261
    %v264 = vmul.f32 %v258, %v262
    %266 = vrot.lane.b32.xlu0 %v264, 32
    %v267 = vpop.permute.xlu0 %266
    %v269 = vadd.f32 %v259, %v267
    %v270 = vtanh.pop %v269
    %272 = vrot.lane.b32.xlu0 %v270, 64
    %v273 = vpop.permute.xlu0 %272
    %v275 = vmul.f32 %v258, %v273
    %v277 = vlaneseq
    %v278 = vshrl.u32 %v277, 7
    %v279 = vsub.s32 0, %v278
    %v280 = vrot.slane %v165, %v279
    %281 = vrot.lane.b32.xlu0 %v280, 96
    %v282 = vpop.permute.xlu0 %281
    %v284 = vmul.f32 %v275, %v282
    %286 = vrot.lane.b32.xlu0 %v284, 32
    %v287 = vpop.permute.xlu0 %286
    %vm289 = vcmask 254976
    %v290 = vsel %vm289, %v287, 0.0
    %291 = vadd.xlane.f32.xlu0 %v290
    %v292 = vpop.xlane.xlu0 %291
    %v293 = vpack.c.bf16 %v275, %v275
    %295 = vrot.lane.b32.xlu0 %v293, 32
    %v296 = vpop.permute.xlu0 %295
    %v298 = vsel %vm183, %v296, 0
    %300 = vmatprep.subr.bf16.mxu0 0
    %301 = vmatpush1.bf16.msra.mxu0 %v179
    %302 = vmatprep.subr.bf16.mxu0 0
    %303 = vmatpush1.bf16.msra.mxu0 %v180
    %304 = vmatprep.subr.bf16.mxu0 0
    %305 = vmatpush1.bf16.msra.mxu0 0
    %306 = vmatprep.subr.bf16.mxu0 0
    %307 = vmatpush1.bf16.msra.mxu0 0
    %308 = vmatprep.subr.bf16.mxu0 0
    %309 = vmatpush1.bf16.msra.mxu0 0
    %310 = vmatprep.subr.bf16.mxu0 0
    %311 = vmatpush1.bf16.msra.mxu0 0
    %312 = vmatprep.subr.bf16.mxu0 0
    %313 = vmatpush1.bf16.msra.mxu0 0
    %314 = vmatprep.subr.bf16.mxu0 0
    %315 = vmatpush1.bf16.msra.mxu0 0
    %316 = vmatprep.subr.bf16.mxu0 0
    %317 = vmatpush1.bf16.msra.mxu0 0
    %318 = vmatprep.subr.bf16.mxu0 0
    %319 = vmatpush1.bf16.msra.mxu0 0
    %320 = vmatprep.subr.bf16.mxu0 0
    %321 = vmatpush1.bf16.msra.mxu0 0
    %322 = vmatprep.subr.bf16.mxu0 0
    %323 = vmatpush1.bf16.msra.mxu0 0
    %324 = vmatprep.subr.bf16.mxu0 0
    %325 = vmatpush1.bf16.msra.mxu0 0
    %326 = vmatprep.subr.bf16.mxu0 0
    %327 = vmatpush1.bf16.msra.mxu0 0
    %328 = vmatprep.subr.bf16.mxu0 0
    %329 = vmatpush1.bf16.msra.mxu0 0
    %330 = vmatprep.subr.bf16.mxu0 0
    %331 = vmatpush1.bf16.msra.mxu0 0
    %332 = vmatprep.mubr.bf16.mxu0 0
    %333 = vmatmul.mubr.bf16.gmra.mrb[0].mxu0 %v298
    %v334 = vpop.f32.mrb[0].mxu0
    %v335 = vadd.f32 0.0, %v334
    %v336 = vpop.f32.mrb[0].mxu0
    %v337 = vpop.f32.mrb[0].mxu0
    %v338 = vpop.f32.mrb[0].mxu0
    %339 = vdwg.mxu0
    %v341 = vrot.slane %v335, 7
    %v344 = vadd.f32 %v153, %v341
    %v345 = vadd.f32 %v158, %v335
    %v346 = vtanh.pop %v344
    %v347 = vtanh.pop %v345
    %v348 = vxor.u32 %v344, 2147483648
    %v349 = vxor.u32 %v345, 2147483648
    %v350 = vmul.f32 %v348, 1.442695
    %v351 = vpow.pop %v350
    %v352 = vmul.f32 %v349, 1.442695
    %v353 = vpow.pop %v352
    %v354 = vadd.f32 %v351, 1.0
    %v355 = vadd.f32 %v353, 1.0
    %v356 = vrcp.pop %v354
    %v357 = vmul.f32 1.0, %v356
    %v358 = vrcp.pop %v355
    %v359 = vmul.f32 1.0, %v358
    %v362 = vrot.slane %v346, 1
    %v363 = vsel %vm250, %v347, %v362
    %v367 = vrot.slane %v357, 1
    %v368 = vsel %vm250, %v359, %v367
    %v370 = vsel %vm170, %v363, %v368
    %v371 = vmul.f32 %v370, %v269
    %373 = vrot.lane.b32.xlu0 %v370, 64
    %v374 = vpop.permute.xlu0 %373
    %v376 = vmul.f32 %v370, %v374
    %378 = vrot.lane.b32.xlu0 %v376, 32
    %v379 = vpop.permute.xlu0 %378
    %v381 = vadd.f32 %v371, %v379
    %v382 = vtanh.pop %v381
    %384 = vrot.lane.b32.xlu0 %v382, 64
    %v385 = vpop.permute.xlu0 %384
    %v387 = vmul.f32 %v370, %v385
    %v388 = vmul.f32 %v387, %v282
    %390 = vrot.lane.b32.xlu0 %v388, 32
    %v391 = vpop.permute.xlu0 %390
    %v393 = vsel %vm289, %v391, 0.0
    %394 = vadd.xlane.f32.xlu0 %v393
    %v395 = vpop.xlane.xlu0 %394
    %v396 = vpack.c.bf16 %v387, %v387
    %398 = vrot.lane.b32.xlu0 %v396, 32
    %v399 = vpop.permute.xlu0 %398
    %v401 = vsel %vm183, %v399, 0
    %403 = vmatprep.subr.bf16.mxu0 0
    %404 = vmatpush1.bf16.msra.mxu0 %v179
    %405 = vmatprep.subr.bf16.mxu0 0
    %406 = vmatpush1.bf16.msra.mxu0 %v180
    %407 = vmatprep.subr.bf16.mxu0 0
    %408 = vmatpush1.bf16.msra.mxu0 0
    %409 = vmatprep.subr.bf16.mxu0 0
    %410 = vmatpush1.bf16.msra.mxu0 0
    %411 = vmatprep.subr.bf16.mxu0 0
    %412 = vmatpush1.bf16.msra.mxu0 0
    %413 = vmatprep.subr.bf16.mxu0 0
    %414 = vmatpush1.bf16.msra.mxu0 0
    %415 = vmatprep.subr.bf16.mxu0 0
    %416 = vmatpush1.bf16.msra.mxu0 0
    %417 = vmatprep.subr.bf16.mxu0 0
    %418 = vmatpush1.bf16.msra.mxu0 0
    %419 = vmatprep.subr.bf16.mxu0 0
    %420 = vmatpush1.bf16.msra.mxu0 0
    %421 = vmatprep.subr.bf16.mxu0 0
    %422 = vmatpush1.bf16.msra.mxu0 0
    %423 = vmatprep.subr.bf16.mxu0 0
    %424 = vmatpush1.bf16.msra.mxu0 0
    %425 = vmatprep.subr.bf16.mxu0 0
    %426 = vmatpush1.bf16.msra.mxu0 0
    %427 = vmatprep.subr.bf16.mxu0 0
    %428 = vmatpush1.bf16.msra.mxu0 0
    %429 = vmatprep.subr.bf16.mxu0 0
    %430 = vmatpush1.bf16.msra.mxu0 0
    %431 = vmatprep.subr.bf16.mxu0 0
    %432 = vmatpush1.bf16.msra.mxu0 0
    %433 = vmatprep.subr.bf16.mxu0 0
    %434 = vmatpush1.bf16.msra.mxu0 0
    %435 = vmatprep.mubr.bf16.mxu0 0
    %436 = vmatmul.mubr.bf16.gmra.mrb[0].mxu0 %v401
    %v437 = vpop.f32.mrb[0].mxu0
    %v438 = vadd.f32 0.0, %v437
    %v439 = vpop.f32.mrb[0].mxu0
    %v440 = vpop.f32.mrb[0].mxu0
    %v441 = vpop.f32.mrb[0].mxu0
    %442 = vdwg.mxu0
    %v444 = vrot.slane %v438, 6
    %v445 = vrot.slane %v438, 7
    %v448 = vadd.f32 %v153, %v444
    %v449 = vadd.f32 %v158, %v445
    %v450 = vtanh.pop %v448
    %v451 = vtanh.pop %v449
    %v452 = vxor.u32 %v448, 2147483648
    %v453 = vxor.u32 %v449, 2147483648
    %v454 = vmul.f32 %v452, 1.442695
    %v455 = vpow.pop %v454
    %v456 = vmul.f32 %v453, 1.442695
    %v457 = vpow.pop %v456
    %v458 = vadd.f32 %v455, 1.0
    %v459 = vadd.f32 %v457, 1.0
    %v460 = vrcp.pop %v458
    %v461 = vmul.f32 1.0, %v460
    %v462 = vrcp.pop %v459
    %v463 = vmul.f32 1.0, %v462
    %v466 = vrot.slane %v450, 2
    %v467 = vrot.slane %v451, 1
    %v468 = vsel %vm250, %v467, %v466
    %v472 = vrot.slane %v461, 2
    %v473 = vrot.slane %v463, 1
    %v474 = vsel %vm250, %v473, %v472
    %v476 = vsel %vm170, %v468, %v474
    %v477 = vmul.f32 %v476, %v381
    %479 = vrot.lane.b32.xlu0 %v476, 64
    %v480 = vpop.permute.xlu0 %479
    %v482 = vmul.f32 %v476, %v480
    %484 = vrot.lane.b32.xlu0 %v482, 32
    %v485 = vpop.permute.xlu0 %484
    %v487 = vadd.f32 %v477, %v485
    %v488 = vtanh.pop %v487
    %490 = vrot.lane.b32.xlu0 %v488, 64
    %v491 = vpop.permute.xlu0 %490
    %v493 = vmul.f32 %v476, %v491
    %v494 = vmul.f32 %v493, %v282
    %496 = vrot.lane.b32.xlu0 %v494, 32
    %v497 = vpop.permute.xlu0 %496
    %v499 = vsel %vm289, %v497, 0.0
    %500 = vadd.xlane.f32.xlu0 %v499
    %v501 = vpop.xlane.xlu0 %500
    %v502 = vpack.c.bf16 %v493, %v493
    %504 = vrot.lane.b32.xlu0 %v502, 32
    %v505 = vpop.permute.xlu0 %504
    %v507 = vsel %vm183, %v505, 0
    %509 = vmatprep.subr.bf16.mxu0 0
    %510 = vmatpush1.bf16.msra.mxu0 %v179
    %511 = vmatprep.subr.bf16.mxu0 0
    %512 = vmatpush1.bf16.msra.mxu0 %v180
    %513 = vmatprep.subr.bf16.mxu0 0
    %514 = vmatpush1.bf16.msra.mxu0 0
    %515 = vmatprep.subr.bf16.mxu0 0
    %516 = vmatpush1.bf16.msra.mxu0 0
    %517 = vmatprep.subr.bf16.mxu0 0
    %518 = vmatpush1.bf16.msra.mxu0 0
    %519 = vmatprep.subr.bf16.mxu0 0
    %520 = vmatpush1.bf16.msra.mxu0 0
    %521 = vmatprep.subr.bf16.mxu0 0
    %522 = vmatpush1.bf16.msra.mxu0 0
    %523 = vmatprep.subr.bf16.mxu0 0
    %524 = vmatpush1.bf16.msra.mxu0 0
    %525 = vmatprep.subr.bf16.mxu0 0
    %526 = vmatpush1.bf16.msra.mxu0 0
    %527 = vmatprep.subr.bf16.mxu0 0
    %528 = vmatpush1.bf16.msra.mxu0 0
    %529 = vmatprep.subr.bf16.mxu0 0
    %530 = vmatpush1.bf16.msra.mxu0 0
    %531 = vmatprep.subr.bf16.mxu0 0
    %532 = vmatpush1.bf16.msra.mxu0 0
    %533 = vmatprep.subr.bf16.mxu0 0
    %534 = vmatpush1.bf16.msra.mxu0 0
    %535 = vmatprep.subr.bf16.mxu0 0
    %536 = vmatpush1.bf16.msra.mxu0 0
    %537 = vmatprep.subr.bf16.mxu0 0
    %538 = vmatpush1.bf16.msra.mxu0 0
    %539 = vmatprep.subr.bf16.mxu0 0
    %540 = vmatpush1.bf16.msra.mxu0 0
    %541 = vmatprep.mubr.bf16.mxu0 0
    %542 = vmatmul.mubr.bf16.gmra.mrb[0].mxu0 %v507
    %v543 = vpop.f32.mrb[0].mxu0
    %v544 = vadd.f32 0.0, %v543
    %v545 = vpop.f32.mrb[0].mxu0
    %v546 = vpop.f32.mrb[0].mxu0
    %v547 = vpop.f32.mrb[0].mxu0
    %548 = vdwg.mxu0
    %v550 = vrot.slane %v544, 5
    %v551 = vrot.slane %v544, 6
    %v554 = vadd.f32 %v153, %v550
    %v555 = vadd.f32 %v158, %v551
    %v556 = vtanh.pop %v554
    %v557 = vtanh.pop %v555
    %v558 = vxor.u32 %v554, 2147483648
    %v559 = vxor.u32 %v555, 2147483648
    %v560 = vmul.f32 %v558, 1.442695
    %v561 = vpow.pop %v560
    %v562 = vmul.f32 %v559, 1.442695
    %v563 = vpow.pop %v562
    %v564 = vadd.f32 %v561, 1.0
    %v565 = vadd.f32 %v563, 1.0
    %v566 = vrcp.pop %v564
    %v567 = vmul.f32 1.0, %v566
    %v568 = vrcp.pop %v565
    %v569 = vmul.f32 1.0, %v568
    %v572 = vrot.slane %v556, 3
    %v573 = vrot.slane %v557, 2
    %v574 = vsel %vm250, %v573, %v572
    %v578 = vrot.slane %v567, 3
    %v579 = vrot.slane %v569, 2
    %v580 = vsel %vm250, %v579, %v578
    %v582 = vsel %vm170, %v574, %v580
    %v583 = vmul.f32 %v582, %v487
    %585 = vrot.lane.b32.xlu0 %v582, 64
    %v586 = vpop.permute.xlu0 %585
    %v588 = vmul.f32 %v582, %v586
    %590 = vrot.lane.b32.xlu0 %v588, 32
    %v591 = vpop.permute.xlu0 %590
    %v593 = vadd.f32 %v583, %v591
    %v594 = vtanh.pop %v593
    %596 = vrot.lane.b32.xlu0 %v594, 64
    %v597 = vpop.permute.xlu0 %596
    %v599 = vmul.f32 %v582, %v597
    %v600 = vmul.f32 %v599, %v282
    %602 = vrot.lane.b32.xlu0 %v600, 32
    %v603 = vpop.permute.xlu0 %602
    %v605 = vsel %vm289, %v603, 0.0
    %606 = vadd.xlane.f32.xlu0 %v605
    %v607 = vpop.xlane.xlu0 %606
    %v608 = vpack.c.bf16 %v599, %v599
    %610 = vrot.lane.b32.xlu0 %v608, 32
    %v611 = vpop.permute.xlu0 %610
    %v613 = vsel %vm183, %v611, 0
    %615 = vmatprep.subr.bf16.mxu0 0
    %616 = vmatpush1.bf16.msra.mxu0 %v179
    %617 = vmatprep.subr.bf16.mxu0 0
    %618 = vmatpush1.bf16.msra.mxu0 %v180
    %619 = vmatprep.subr.bf16.mxu0 0
    %620 = vmatpush1.bf16.msra.mxu0 0
    %621 = vmatprep.subr.bf16.mxu0 0
    %622 = vmatpush1.bf16.msra.mxu0 0
    %623 = vmatprep.subr.bf16.mxu0 0
    %624 = vmatpush1.bf16.msra.mxu0 0
    %625 = vmatprep.subr.bf16.mxu0 0
    %626 = vmatpush1.bf16.msra.mxu0 0
    %627 = vmatprep.subr.bf16.mxu0 0
    %628 = vmatpush1.bf16.msra.mxu0 0
    %629 = vmatprep.subr.bf16.mxu0 0
    %630 = vmatpush1.bf16.msra.mxu0 0
    %631 = vmatprep.subr.bf16.mxu0 0
    %632 = vmatpush1.bf16.msra.mxu0 0
    %633 = vmatprep.subr.bf16.mxu0 0
    %634 = vmatpush1.bf16.msra.mxu0 0
    %635 = vmatprep.subr.bf16.mxu0 0
    %636 = vmatpush1.bf16.msra.mxu0 0
    %637 = vmatprep.subr.bf16.mxu0 0
    %638 = vmatpush1.bf16.msra.mxu0 0
    %639 = vmatprep.subr.bf16.mxu0 0
    %640 = vmatpush1.bf16.msra.mxu0 0
    %641 = vmatprep.subr.bf16.mxu0 0
    %642 = vmatpush1.bf16.msra.mxu0 0
    %643 = vmatprep.subr.bf16.mxu0 0
    %644 = vmatpush1.bf16.msra.mxu0 0
    %645 = vmatprep.subr.bf16.mxu0 0
    %646 = vmatpush1.bf16.msra.mxu0 0
    %647 = vmatprep.mubr.bf16.mxu0 0
    %648 = vmatmul.mubr.bf16.gmra.mrb[0].mxu0 %v613
    %v649 = vpop.f32.mrb[0].mxu0
    %v650 = vadd.f32 0.0, %v649
    %v651 = vpop.f32.mrb[0].mxu0
    %v652 = vpop.f32.mrb[0].mxu0
    %v653 = vpop.f32.mrb[0].mxu0
    %654 = vdwg.mxu0
    %v656 = vrot.slane %v650, 4
    %v657 = vrot.slane %v650, 5
    %v660 = vadd.f32 %v153, %v656
    %v661 = vadd.f32 %v158, %v657
    %v662 = vtanh.pop %v660
    %v663 = vtanh.pop %v661
    %v664 = vxor.u32 %v660, 2147483648
    %v665 = vxor.u32 %v661, 2147483648
    %v666 = vmul.f32 %v664, 1.442695
    %v667 = vpow.pop %v666
    %v668 = vmul.f32 %v665, 1.442695
    %v669 = vpow.pop %v668
    %v670 = vadd.f32 %v667, 1.0
    %v671 = vadd.f32 %v669, 1.0
    %v672 = vrcp.pop %v670
    %v673 = vmul.f32 1.0, %v672
    %v674 = vrcp.pop %v671
    %v675 = vmul.f32 1.0, %v674
    %v678 = vrot.slane %v662, 4
    %v679 = vrot.slane %v663, 3
    %v680 = vsel %vm250, %v679, %v678
    %v684 = vrot.slane %v673, 4
    %v685 = vrot.slane %v675, 3
    %v686 = vsel %vm250, %v685, %v684
    %v688 = vsel %vm170, %v680, %v686
    %v689 = vmul.f32 %v688, %v593
    %691 = vrot.lane.b32.xlu0 %v688, 64
    %v692 = vpop.permute.xlu0 %691
    %v694 = vmul.f32 %v688, %v692
    %696 = vrot.lane.b32.xlu0 %v694, 32
    %v697 = vpop.permute.xlu0 %696
    %v699 = vadd.f32 %v689, %v697
    %v700 = vtanh.pop %v699
    %702 = vrot.lane.b32.xlu0 %v700, 64
    %v703 = vpop.permute.xlu0 %702
    %v705 = vmul.f32 %v688, %v703
    %v706 = vmul.f32 %v705, %v282
    %708 = vrot.lane.b32.xlu0 %v706, 32
    %v709 = vpop.permute.xlu0 %708
    %v711 = vsel %vm289, %v709, 0.0
    %712 = vadd.xlane.f32.xlu0 %v711
    %v713 = vpop.xlane.xlu0 %712
    %v714 = vpack.c.bf16 %v705, %v705
    %716 = vrot.lane.b32.xlu0 %v714, 32
    %v717 = vpop.permute.xlu0 %716
    %v719 = vsel %vm183, %v717, 0
    %721 = vmatprep.subr.bf16.mxu0 0
    %722 = vmatpush1.bf16.msra.mxu0 %v179
    %723 = vmatprep.subr.bf16.mxu0 0
    %724 = vmatpush1.bf16.msra.mxu0 %v180
    %725 = vmatprep.subr.bf16.mxu0 0
    %726 = vmatpush1.bf16.msra.mxu0 0
    %727 = vmatprep.subr.bf16.mxu0 0
    %728 = vmatpush1.bf16.msra.mxu0 0
    %729 = vmatprep.subr.bf16.mxu0 0
    %730 = vmatpush1.bf16.msra.mxu0 0
    %731 = vmatprep.subr.bf16.mxu0 0
    %732 = vmatpush1.bf16.msra.mxu0 0
    %733 = vmatprep.subr.bf16.mxu0 0
    %734 = vmatpush1.bf16.msra.mxu0 0
    %735 = vmatprep.subr.bf16.mxu0 0
    %736 = vmatpush1.bf16.msra.mxu0 0
    %737 = vmatprep.subr.bf16.mxu0 0
    %738 = vmatpush1.bf16.msra.mxu0 0
    %739 = vmatprep.subr.bf16.mxu0 0
    %740 = vmatpush1.bf16.msra.mxu0 0
    %741 = vmatprep.subr.bf16.mxu0 0
    %742 = vmatpush1.bf16.msra.mxu0 0
    %743 = vmatprep.subr.bf16.mxu0 0
    %744 = vmatpush1.bf16.msra.mxu0 0
    %745 = vmatprep.subr.bf16.mxu0 0
    %746 = vmatpush1.bf16.msra.mxu0 0
    %747 = vmatprep.subr.bf16.mxu0 0
    %748 = vmatpush1.bf16.msra.mxu0 0
    %749 = vmatprep.subr.bf16.mxu0 0
    %750 = vmatpush1.bf16.msra.mxu0 0
    %751 = vmatprep.subr.bf16.mxu0 0
    %752 = vmatpush1.bf16.msra.mxu0 0
    %753 = vmatprep.mubr.bf16.mxu0 0
    %754 = vmatmul.mubr.bf16.gmra.mrb[0].mxu0 %v719
    %v755 = vpop.f32.mrb[0].mxu0
    %v756 = vadd.f32 0.0, %v755
    %v757 = vpop.f32.mrb[0].mxu0
    %v758 = vpop.f32.mrb[0].mxu0
    %v759 = vpop.f32.mrb[0].mxu0
    %760 = vdwg.mxu0
    %v762 = vrot.slane %v756, 3
    %v763 = vrot.slane %v756, 4
    %v766 = vadd.f32 %v153, %v762
    %v767 = vadd.f32 %v158, %v763
    %v768 = vtanh.pop %v766
    %v769 = vtanh.pop %v767
    %v770 = vxor.u32 %v766, 2147483648
    %v771 = vxor.u32 %v767, 2147483648
    %v772 = vmul.f32 %v770, 1.442695
    %v773 = vpow.pop %v772
    %v774 = vmul.f32 %v771, 1.442695
    %v775 = vpow.pop %v774
    %v776 = vadd.f32 %v773, 1.0
    %v777 = vadd.f32 %v775, 1.0
    %v778 = vrcp.pop %v776
    %v779 = vmul.f32 1.0, %v778
    %v780 = vrcp.pop %v777
    %v781 = vmul.f32 1.0, %v780
    %v784 = vrot.slane %v768, 5
    %v785 = vrot.slane %v769, 4
    %v786 = vsel %vm250, %v785, %v784
    %v790 = vrot.slane %v779, 5
    %v791 = vrot.slane %v781, 4
    %v792 = vsel %vm250, %v791, %v790
    %v794 = vsel %vm170, %v786, %v792
    %v795 = vmul.f32 %v794, %v699
    %797 = vrot.lane.b32.xlu0 %v794, 64
    %v798 = vpop.permute.xlu0 %797
    %v800 = vmul.f32 %v794, %v798
    %802 = vrot.lane.b32.xlu0 %v800, 32
    %v803 = vpop.permute.xlu0 %802
    %v805 = vadd.f32 %v795, %v803
    %v806 = vtanh.pop %v805
    %808 = vrot.lane.b32.xlu0 %v806, 64
    %v809 = vpop.permute.xlu0 %808
    %v811 = vmul.f32 %v794, %v809
    %v812 = vmul.f32 %v811, %v282
    %814 = vrot.lane.b32.xlu0 %v812, 32
    %v815 = vpop.permute.xlu0 %814
    %v817 = vsel %vm289, %v815, 0.0
    %818 = vadd.xlane.f32.xlu0 %v817
    %v819 = vpop.xlane.xlu0 %818
    %v820 = vpack.c.bf16 %v811, %v811
    %822 = vrot.lane.b32.xlu0 %v820, 32
    %v823 = vpop.permute.xlu0 %822
    %v825 = vsel %vm183, %v823, 0
    %827 = vmatprep.subr.bf16.mxu0 0
    %828 = vmatpush1.bf16.msra.mxu0 %v179
    %829 = vmatprep.subr.bf16.mxu0 0
    %830 = vmatpush1.bf16.msra.mxu0 %v180
    %831 = vmatprep.subr.bf16.mxu0 0
    %832 = vmatpush1.bf16.msra.mxu0 0
    %833 = vmatprep.subr.bf16.mxu0 0
    %834 = vmatpush1.bf16.msra.mxu0 0
    %835 = vmatprep.subr.bf16.mxu0 0
    %836 = vmatpush1.bf16.msra.mxu0 0
    %837 = vmatprep.subr.bf16.mxu0 0
    %838 = vmatpush1.bf16.msra.mxu0 0
    %839 = vmatprep.subr.bf16.mxu0 0
    %840 = vmatpush1.bf16.msra.mxu0 0
    %841 = vmatprep.subr.bf16.mxu0 0
    %842 = vmatpush1.bf16.msra.mxu0 0
    %843 = vmatprep.subr.bf16.mxu0 0
    %844 = vmatpush1.bf16.msra.mxu0 0
    %845 = vmatprep.subr.bf16.mxu0 0
    %846 = vmatpush1.bf16.msra.mxu0 0
    %847 = vmatprep.subr.bf16.mxu0 0
    %848 = vmatpush1.bf16.msra.mxu0 0
    %849 = vmatprep.subr.bf16.mxu0 0
    %850 = vmatpush1.bf16.msra.mxu0 0
    %851 = vmatprep.subr.bf16.mxu0 0
    %852 = vmatpush1.bf16.msra.mxu0 0
    %853 = vmatprep.subr.bf16.mxu0 0
    %854 = vmatpush1.bf16.msra.mxu0 0
    %855 = vmatprep.subr.bf16.mxu0 0
    %856 = vmatpush1.bf16.msra.mxu0 0
    %857 = vmatprep.subr.bf16.mxu0 0
    %858 = vmatpush1.bf16.msra.mxu0 0
    %859 = vmatprep.mubr.bf16.mxu0 0
    %860 = vmatmul.mubr.bf16.gmra.mrb[0].mxu0 %v825
    %v861 = vpop.f32.mrb[0].mxu0
    %v862 = vadd.f32 0.0, %v861
    %v863 = vpop.f32.mrb[0].mxu0
    %v864 = vpop.f32.mrb[0].mxu0
    %v865 = vpop.f32.mrb[0].mxu0
    %866 = vdwg.mxu0
    %v868 = vrot.slane %v862, 2
    %v869 = vrot.slane %v862, 3
    %v872 = vadd.f32 %v153, %v868
    %v873 = vadd.f32 %v158, %v869
    %v874 = vtanh.pop %v872
    %v875 = vtanh.pop %v873
    %v876 = vxor.u32 %v872, 2147483648
    %v877 = vxor.u32 %v873, 2147483648
    %v878 = vmul.f32 %v876, 1.442695
    %v879 = vpow.pop %v878
    %v880 = vmul.f32 %v877, 1.442695
    %v881 = vpow.pop %v880
    %v882 = vadd.f32 %v879, 1.0
    %v883 = vadd.f32 %v881, 1.0
    %v884 = vrcp.pop %v882
    %v885 = vmul.f32 1.0, %v884
    %v886 = vrcp.pop %v883
    %v887 = vmul.f32 1.0, %v886
    %v890 = vrot.slane %v874, 6
    %v891 = vrot.slane %v875, 5
    %v892 = vsel %vm250, %v891, %v890
    %v896 = vrot.slane %v885, 6
    %v897 = vrot.slane %v887, 5
    %v898 = vsel %vm250, %v897, %v896
    %v900 = vsel %vm170, %v892, %v898
    %v901 = vmul.f32 %v900, %v805
    %903 = vrot.lane.b32.xlu0 %v900, 64
    %v904 = vpop.permute.xlu0 %903
    %v906 = vmul.f32 %v900, %v904
    %908 = vrot.lane.b32.xlu0 %v906, 32
    %v909 = vpop.permute.xlu0 %908
    %v911 = vadd.f32 %v901, %v909
    %v912 = vtanh.pop %v911
    %914 = vrot.lane.b32.xlu0 %v912, 64
    %v915 = vpop.permute.xlu0 %914
    %v917 = vmul.f32 %v900, %v915
    %v918 = vmul.f32 %v917, %v282
    %920 = vrot.lane.b32.xlu0 %v918, 32
    %v921 = vpop.permute.xlu0 %920
    %v923 = vsel %vm289, %v921, 0.0
    %924 = vadd.xlane.f32.xlu0 %v923
    %v925 = vpop.xlane.xlu0 %924
    %v926 = vpack.c.bf16 %v917, %v917
    %928 = vrot.lane.b32.xlu0 %v926, 32
    %v929 = vpop.permute.xlu0 %928
    %v931 = vsel %vm183, %v929, 0
    %933 = vmatprep.subr.bf16.mxu0 0
    %934 = vmatpush1.bf16.msra.mxu0 %v179
    %935 = vmatprep.subr.bf16.mxu0 0
    %936 = vmatpush1.bf16.msra.mxu0 %v180
    %937 = vmatprep.subr.bf16.mxu0 0
    %938 = vmatpush1.bf16.msra.mxu0 0
    %939 = vmatprep.subr.bf16.mxu0 0
    %940 = vmatpush1.bf16.msra.mxu0 0
    %941 = vmatprep.subr.bf16.mxu0 0
    %942 = vmatpush1.bf16.msra.mxu0 0
    %943 = vmatprep.subr.bf16.mxu0 0
    %944 = vmatpush1.bf16.msra.mxu0 0
    %945 = vmatprep.subr.bf16.mxu0 0
    %946 = vmatpush1.bf16.msra.mxu0 0
    %947 = vmatprep.subr.bf16.mxu0 0
    %948 = vmatpush1.bf16.msra.mxu0 0
    %949 = vmatprep.subr.bf16.mxu0 0
    %950 = vmatpush1.bf16.msra.mxu0 0
    %951 = vmatprep.subr.bf16.mxu0 0
    %952 = vmatpush1.bf16.msra.mxu0 0
    %953 = vmatprep.subr.bf16.mxu0 0
    %954 = vmatpush1.bf16.msra.mxu0 0
    %955 = vmatprep.subr.bf16.mxu0 0
    %956 = vmatpush1.bf16.msra.mxu0 0
    %957 = vmatprep.subr.bf16.mxu0 0
    %958 = vmatpush1.bf16.msra.mxu0 0
    %959 = vmatprep.subr.bf16.mxu0 0
    %960 = vmatpush1.bf16.msra.mxu0 0
    %961 = vmatprep.subr.bf16.mxu0 0
    %962 = vmatpush1.bf16.msra.mxu0 0
    %963 = vmatprep.subr.bf16.mxu0 0
    %964 = vmatpush1.bf16.msra.mxu0 0
    %965 = vmatprep.mubr.bf16.mxu0 0
    %966 = vmatmul.mubr.bf16.gmra.mrb[0].mxu0 %v931
    %v967 = vpop.f32.mrb[0].mxu0
    %v968 = vadd.f32 0.0, %v967
    %v969 = vpop.f32.mrb[0].mxu0
    %v970 = vpop.f32.mrb[0].mxu0
    %v971 = vpop.f32.mrb[0].mxu0
    %972 = vdwg.mxu0
    %v974 = vrot.slane %v968, 1
    %v975 = vrot.slane %v968, 2
    %v978 = vadd.f32 %v153, %v974
    %v979 = vadd.f32 %v158, %v975
    %v980 = vtanh.pop %v978
    %v981 = vtanh.pop %v979
    %v982 = vxor.u32 %v978, 2147483648
    %v983 = vxor.u32 %v979, 2147483648
    %v984 = vmul.f32 %v982, 1.442695
    %v985 = vpow.pop %v984
    %v986 = vmul.f32 %v983, 1.442695
    %v987 = vpow.pop %v986
    %v988 = vadd.f32 %v985, 1.0
    %v989 = vadd.f32 %v987, 1.0
    %v990 = vrcp.pop %v988
    %v991 = vmul.f32 1.0, %v990
    %v992 = vrcp.pop %v989
    %v993 = vmul.f32 1.0, %v992
    %v996 = vrot.slane %v980, 7
    %v997 = vrot.slane %v981, 6
    %v998 = vsel %vm250, %v997, %v996
    %v1002 = vrot.slane %v991, 7
    %v1003 = vrot.slane %v993, 6
    %v1004 = vsel %vm250, %v1003, %v1002
    %v1006 = vsel %vm170, %v998, %v1004
    %v1007 = vmul.f32 %v1006, %v911
    %1009 = vrot.lane.b32.xlu0 %v1006, 64
    %v1010 = vpop.permute.xlu0 %1009
    %v1012 = vmul.f32 %v1006, %v1010
    %1014 = vrot.lane.b32.xlu0 %v1012, 32
    %v1015 = vpop.permute.xlu0 %1014
    %v1017 = vadd.f32 %v1007, %v1015
    %v1018 = vtanh.pop %v1017
    %1020 = vrot.lane.b32.xlu0 %v1018, 64
    %v1021 = vpop.permute.xlu0 %1020
    %v1023 = vmul.f32 %v1006, %v1021
    %v1024 = vmul.f32 %v1023, %v282
    %1026 = vrot.lane.b32.xlu0 %v1024, 32
    %v1027 = vpop.permute.xlu0 %1026
    %v1029 = vsel %vm289, %v1027, 0.0
    %1030 = vadd.xlane.f32.xlu0 %v1029
    %v1031 = vpop.xlane.xlu0 %1030
    %vm1032 = vcmask 7168
    %v1033 = vsel %vm1032, %v292, %v395
    %vm1034 = vcmask 15360
    %v1035 = vsel %vm1034, %v1033, %v501
    %vm1036 = vcmask 23552
    %v1037 = vsel %vm1036, %v1035, %v607
    %vm1038 = vcmask 31744
    %v1039 = vsel %vm1038, %v1037, %v713
    %vm1040 = vcmask 39936
    %v1041 = vsel %vm1040, %v1039, %v819
    %vm1042 = vcmask 48128
    %v1043 = vsel %vm1042, %v1041, %v925
    %vm1044 = vcmask 56320
    %v1045 = vsel %vm1044, %v1043, %v1031
    %v1046 = vld [vmem:[#allocation2] sm:$0x1]
    %v1048 = vlaneseq
    %v1049 = vshrl.u32 %v1048, 7
    %v1050 = vsub.s32 0, %v1049
    %v1051 = vrot.slane %v1046, %v1050
    %1052 = vset.pattern.permute.xlu0 0
    %1053 = vperm.xlu0 %1052, %v1051
    %v1054 = vpop.permute.xlu0 %1053
    %v1056 = vadd.f32 %v1045, %v1054
    %vm1057 = vcmask 58368
    %1058 = vst.msk [vmem:[#allocation9] sm:$0x3] %vm1057, %v1056
    // Predicated region
    $region38: #{tpu_custom_call.1} parent=1 // pred_check
      _
    $region39: #{tpu_custom_call.1} parent=1 // pred_check_branch
      %1060 = sbr.rel (0) target = $region41
    $region40: #{tpu_custom_call.1} parent=1 // pred_region
      %s1062 = ssub.s32 32, 32
      %1063 = vsyncadd [#allocation5], %s1062
      %s1065 = sshll.u32 [#allocation9], 4
      %s1066 = int_to_ptr.vmem [resolvable:$true] %s1065
      %1068 = dma.vmem_to_hbm [thread:$0]  %s1066, 32, %s6, [#allocation5]
    $region41: #{tpu_custom_call.1} parent=1 // pred_fallthru
      _
    // Predicated region
    $region42: #{tpu_custom_call.1} parent=1 // pred_check
      _
    $region43: #{tpu_custom_call.1} parent=1 // pred_check_branch
      %1070 = sbr.rel (0) target = $region45
    $region44: #{tpu_custom_call.1} parent=1 // pred_region
      %1071 = dma.done [#allocation5], 32
    $region45: #{tpu_custom_call.1} parent=1 // pred_fallthru
      _
    %1072 = vsyncpa [#allocation4], 1
    %1073 = vsyncpa [#allocation7], 1
    %1074 = vsyncpa [#allocation5], 1

</llo_original>
